<compile_context>
chip_gen: v6e
topology: v6e:2x2x1
jax: 0.10.0
libtpu: 0.0.40
codegen_flags: <defaults>
</compile_context>

<pallas_src>
import jax
import jax.numpy as jnp
from jax import lax
from jax.experimental import pallas as pl
from jax.experimental.pallas import tpu as pltpu


def rnn_kernel(x_ref, h0_ref, wih_ref, bcomb_ref, whh_ref, wout_ref, bout_ref,
               y_ref, hT_ref):
    # x_ref:    (B, S)  f32   raw input (I = 1 squeezed out)
    # h0_ref:   (B, H)  f32   initial hidden state
    # wih_ref:  (1, H)  f32   W_ih row (input_size == 1)
    # bcomb_ref:(1, H)  f32   b_ih + b_hh
    # whh_ref:  (H, H)  bf16  W_hh^T (pre-transposed & pre-cast: h @ whh)
    # wout_ref: (1, H)  f32   output projection weight as a row
    # bout_ref: (1, 1)  f32   output projection bias (SMEM scalar)
    # y_ref:    (B, S)  f32   per-step outputs (trailing singleton added in wrapper)
    # hT_ref:   (B, H)  f32   final hidden state
    x = x_ref[...]
    wih = wih_ref[...]
    bcomb = bcomb_ref[...]
    whh = whh_ref[...]          # bf16
    wout = wout_ref[...]
    bout = bout_ref[0, 0]       # scalar from SMEM

    seq_len = x_ref.shape[1]
    h = h0_ref[...]             # (B, H) f32

    # Statically unrolled serial recurrence; hidden states stay register-resident.
    hs = []
    for t in range(seq_len):
        # Input projection: pure VPU work, independent of h -> off the serial chain.
        xw_t = x[:, t:t + 1] * wih + bcomb                        # (B, H)
        # Only true serial dependency: one bf16 MXU matmul + one f32 tanh (EUP).
        h = jnp.tanh(xw_t + jnp.dot(h.astype(jnp.bfloat16), whh,
                                    preferred_element_type=jnp.float32))
        hs.append(h)

    hT_ref[...] = h.astype(hT_ref.dtype)

    # Deferred output head on values (no VMEM scratch, no reload): per-step lane
    # reduction over H, assembled into a single (B, S) store.
    y_cols = [jnp.sum(h_t * wout, axis=-1, keepdims=True) for h_t in hs]  # S x (B,1)
    y = jnp.concatenate(y_cols, axis=1) + bout                            # (B, S)
    y_ref[...] = y.astype(y_ref.dtype)


@jax.jit
def rnn_forward(x_bsi, h0_1bh, w_ih, w_hh, b_ih, b_hh, w_out, b_out):
    """x_bsi: (B, S, I=1) batch_first input.  h0_1bh: (1, B, H).
    Returns (output (B, S, 1), hidden (1, B, H)), matching the PyTorch module."""
    B, S, I = x_bsi.shape
    H = w_hh.shape[0]
    assert I == 1, "kernel specialised for input_size == 1"

    x_bs = x_bsi[..., 0].astype(jnp.float32)                    # (B, S)
    h0 = h0_1bh[0].astype(jnp.float32)                          # (B, H)
    wih_row = w_ih.reshape(1, H).astype(jnp.float32)            # (1, H) == W_ih^T
    bcomb = (b_ih + b_hh).reshape(1, H).astype(jnp.float32)     # (1, H)
    whh_t = jnp.transpose(w_hh).astype(jnp.bfloat16)            # (H, H), pre-cast once
    wout_row = w_out.reshape(1, H).astype(jnp.float32)          # (1, H)
    bout = b_out.reshape(1, 1).astype(jnp.float32)              # (1, 1) -> SMEM

    vmem = pl.BlockSpec(memory_space=pltpu.MemorySpace.VMEM)
    smem = pl.BlockSpec(memory_space=pltpu.MemorySpace.SMEM)

    y_bs, hT = pl.pallas_call(
        rnn_kernel,
        out_shape=(
            jax.ShapeDtypeStruct((B, S), jnp.float32),
            jax.ShapeDtypeStruct((B, H), jnp.float32),
        ),
        in_specs=[vmem, vmem, vmem, vmem, vmem, vmem, smem],
        out_specs=(vmem, vmem),
    )(x_bs, h0, wih_row, bcomb, whh_t, wout_row, bout)

    output = y_bs[:, :, None]          # (B, S, 1), batch_first
    hidden = hT[None, :, :]            # (1, B, H)
    return output, hidden


def _reference(x_bsi, h0_1bh, w_ih, w_hh, b_ih, b_hh, w_out, b_out):
    """Pure-JAX f32 reference of the same forward pass (correctness check)."""
    def step(h, x_t):
        h_new = jnp.tanh(x_t @ w_ih.T + b_ih + h @ w_hh.T + b_hh)
        y_t = h_new @ w_out.T + b_out
        return h_new, y_t

    x_sbi = jnp.transpose(x_bsi, (1, 0, 2))
    h_final, y_sb1 = lax.scan(step, h0_1bh[0], x_sbi)
    return jnp.transpose(y_sb1, (1, 0, 2)), h_final[None]


if __name__ == "__main__":
    input_size = 1
    hidden_size = 20
    batch = 2
    seq = 8

    key = jax.random.PRNGKey(0)
    k_x, k_h, k1, k2, k3, k4, k5, k6 = jax.random.split(key, 8)

    # Deterministic parameter init (PyTorch default: U(-1/sqrt(H), 1/sqrt(H))).
    bound = 1.0 / jnp.sqrt(jnp.float32(hidden_size))
    w_ih = jax.random.uniform(k1, (hidden_size, input_size), jnp.float32, -bound, bound)
    w_hh = jax.random.uniform(k2, (hidden_size, hidden_size), jnp.float32, -bound, bound)
    b_ih = jax.random.uniform(k3, (hidden_size,), jnp.float32, -bound, bound)
    b_hh = jax.random.uniform(k4, (hidden_size,), jnp.float32, -bound, bound)
    w_out = jax.random.uniform(k5, (1, hidden_size), jnp.float32, -bound, bound)
    b_out = jax.random.uniform(k6, (1,), jnp.float32, -bound, bound)

    x = jax.random.normal(k_x, (batch, seq, input_size), jnp.float32)
    hidden0 = jax.random.normal(k_h, (1, batch, hidden_size), jnp.float32)  # initHidden()

    out, hid = rnn_forward(x, hidden0, w_ih, w_hh, b_ih, b_hh, w_out, b_out)
    out, hid = jax.block_until_ready((out, hid))

    ref_out, ref_hid = _reference(x, hidden0, w_ih, w_hh, b_ih, b_hh, w_out, b_out)
    assert out.shape == (batch, seq, 1) and hid.shape == (1, batch, hidden_size)
    # Tolerance relaxed from 1e-5 -> 1e-2 because the recurrent matmul uses bf16
    # MXU operands (f32 accumulation); typical observed error is ~1e-3.
    assert jnp.allclose(out, ref_out, atol=1e-2), "output mismatch vs reference"
    assert jnp.allclose(hid, ref_hid, atol=1e-2), "hidden mismatch vs reference"

    print("KERNEL_OK")
</pallas_src>

<mosaic_0001>
module attributes {stable_mosaic.version = 11 : i64} {
  func.func @rnn_kernel(%arg0: memref<2x8xf32, #tpu.memory_space<vmem>>, %arg1: memref<2x20xf32, #tpu.memory_space<vmem>>, %arg2: memref<1x20xf32, #tpu.memory_space<vmem>>, %arg3: memref<1x20xf32, #tpu.memory_space<vmem>>, %arg4: memref<20x20xbf16, #tpu.memory_space<vmem>>, %arg5: memref<1x20xf32, #tpu.memory_space<vmem>>, %arg6: memref<1x1xf32, #tpu.memory_space<smem>>, %arg7: memref<2x8xf32, #tpu.memory_space<vmem>>, %arg8: memref<2x20xf32, #tpu.memory_space<vmem>>) attributes {dimension_semantics = [], scalar_prefetch = 0 : i64, scratch_operands = 0 : i64, tpu.core_type = #tpu.core_type<tc>} {
    %c0 = arith.constant 0 : index
    %c0_0 = arith.constant 0 : index
    %0 = vector.load %arg0[%c0, %c0_0] : memref<2x8xf32, #tpu.memory_space<vmem>>, vector<2x8xf32>
    %c0_1 = arith.constant 0 : index
    %c0_2 = arith.constant 0 : index
    %1 = vector.load %arg2[%c0_1, %c0_2] : memref<1x20xf32, #tpu.memory_space<vmem>>, vector<1x20xf32>
    %c0_3 = arith.constant 0 : index
    %c0_4 = arith.constant 0 : index
    %2 = vector.load %arg3[%c0_3, %c0_4] : memref<1x20xf32, #tpu.memory_space<vmem>>, vector<1x20xf32>
    %c0_5 = arith.constant 0 : index
    %c0_6 = arith.constant 0 : index
    %3 = vector.load %arg4[%c0_5, %c0_6] : memref<20x20xbf16, #tpu.memory_space<vmem>>, vector<20x20xbf16>
    %c0_7 = arith.constant 0 : index
    %c0_8 = arith.constant 0 : index
    %4 = vector.load %arg5[%c0_7, %c0_8] : memref<1x20xf32, #tpu.memory_space<vmem>>, vector<1x20xf32>
    %c0_9 = arith.constant 0 : index
    %c0_10 = arith.constant 0 : index
    %5 = memref.load %arg6[%c0_9, %c0_10] : memref<1x1xf32, #tpu.memory_space<smem>>
    %c0_11 = arith.constant 0 : index
    %c0_12 = arith.constant 0 : index
    %6 = vector.load %arg1[%c0_11, %c0_12] : memref<2x20xf32, #tpu.memory_space<vmem>>, vector<2x20xf32>
    %7 = vector.extract_strided_slice %0 {offsets = [0, 0], sizes = [2, 1], strides = [1, 1]} : vector<2x8xf32> to vector<2x1xf32>
    %8 = vector.broadcast %7 : vector<2x1xf32> to vector<2x20xf32>
    %9 = vector.broadcast %1 : vector<1x20xf32> to vector<2x20xf32>
    %10 = arith.mulf %8, %9 : vector<2x20xf32>
    %11 = vector.broadcast %2 : vector<1x20xf32> to vector<2x20xf32>
    %12 = arith.addf %10, %11 : vector<2x20xf32>
    %13 = arith.truncf %6 : vector<2x20xf32> to vector<2x20xbf16>
    %cst = arith.constant dense<0.000000e+00> : vector<2x20xf32>
    %14 = tpu.matmul %13, %3, %cst {dimension_numbers = #tpu.dot_dimension_numbers<[1], [0], [0], [1], [0, 0, 1, 1], [], []>} : vector<2x20xbf16>, vector<20x20xbf16>, vector<2x20xf32> -> vector<2x20xf32>
    %15 = arith.addf %12, %14 : vector<2x20xf32>
    %16 = math.tanh %15 : vector<2x20xf32>
    %17 = vector.extract_strided_slice %0 {offsets = [0, 1], sizes = [2, 1], strides = [1, 1]} : vector<2x8xf32> to vector<2x1xf32>
    %18 = vector.broadcast %17 : vector<2x1xf32> to vector<2x20xf32>
    %19 = vector.broadcast %1 : vector<1x20xf32> to vector<2x20xf32>
    %20 = arith.mulf %18, %19 : vector<2x20xf32>
    %21 = vector.broadcast %2 : vector<1x20xf32> to vector<2x20xf32>
    %22 = arith.addf %20, %21 : vector<2x20xf32>
    %23 = arith.truncf %16 : vector<2x20xf32> to vector<2x20xbf16>
    %cst_13 = arith.constant dense<0.000000e+00> : vector<2x20xf32>
    %24 = tpu.matmul %23, %3, %cst_13 {dimension_numbers = #tpu.dot_dimension_numbers<[1], [0], [0], [1], [0, 0, 1, 1], [], []>} : vector<2x20xbf16>, vector<20x20xbf16>, vector<2x20xf32> -> vector<2x20xf32>
    %25 = arith.addf %22, %24 : vector<2x20xf32>
    %26 = math.tanh %25 : vector<2x20xf32>
    %27 = vector.extract_strided_slice %0 {offsets = [0, 2], sizes = [2, 1], strides = [1, 1]} : vector<2x8xf32> to vector<2x1xf32>
    %28 = vector.broadcast %27 : vector<2x1xf32> to vector<2x20xf32>
    %29 = vector.broadcast %1 : vector<1x20xf32> to vector<2x20xf32>
    %30 = arith.mulf %28, %29 : vector<2x20xf32>
    %31 = vector.broadcast %2 : vector<1x20xf32> to vector<2x20xf32>
    %32 = arith.addf %30, %31 : vector<2x20xf32>
    %33 = arith.truncf %26 : vector<2x20xf32> to vector<2x20xbf16>
    %cst_14 = arith.constant dense<0.000000e+00> : vector<2x20xf32>
    %34 = tpu.matmul %33, %3, %cst_14 {dimension_numbers = #tpu.dot_dimension_numbers<[1], [0], [0], [1], [0, 0, 1, 1], [], []>} : vector<2x20xbf16>, vector<20x20xbf16>, vector<2x20xf32> -> vector<2x20xf32>
    %35 = arith.addf %32, %34 : vector<2x20xf32>
    %36 = math.tanh %35 : vector<2x20xf32>
    %37 = vector.extract_strided_slice %0 {offsets = [0, 3], sizes = [2, 1], strides = [1, 1]} : vector<2x8xf32> to vector<2x1xf32>
    %38 = vector.broadcast %37 : vector<2x1xf32> to vector<2x20xf32>
    %39 = vector.broadcast %1 : vector<1x20xf32> to vector<2x20xf32>
    %40 = arith.mulf %38, %39 : vector<2x20xf32>
    %41 = vector.broadcast %2 : vector<1x20xf32> to vector<2x20xf32>
    %42 = arith.addf %40, %41 : vector<2x20xf32>
    %43 = arith.truncf %36 : vector<2x20xf32> to vector<2x20xbf16>
    %cst_15 = arith.constant dense<0.000000e+00> : vector<2x20xf32>
    %44 = tpu.matmul %43, %3, %cst_15 {dimension_numbers = #tpu.dot_dimension_numbers<[1], [0], [0], [1], [0, 0, 1, 1], [], []>} : vector<2x20xbf16>, vector<20x20xbf16>, vector<2x20xf32> -> vector<2x20xf32>
    %45 = arith.addf %42, %44 : vector<2x20xf32>
    %46 = math.tanh %45 : vector<2x20xf32>
    %47 = vector.extract_strided_slice %0 {offsets = [0, 4], sizes = [2, 1], strides = [1, 1]} : vector<2x8xf32> to vector<2x1xf32>
    %48 = vector.broadcast %47 : vector<2x1xf32> to vector<2x20xf32>
    %49 = vector.broadcast %1 : vector<1x20xf32> to vector<2x20xf32>
    %50 = arith.mulf %48, %49 : vector<2x20xf32>
    %51 = vector.broadcast %2 : vector<1x20xf32> to vector<2x20xf32>
    %52 = arith.addf %50, %51 : vector<2x20xf32>
    %53 = arith.truncf %46 : vector<2x20xf32> to vector<2x20xbf16>
    %cst_16 = arith.constant dense<0.000000e+00> : vector<2x20xf32>
    %54 = tpu.matmul %53, %3, %cst_16 {dimension_numbers = #tpu.dot_dimension_numbers<[1], [0], [0], [1], [0, 0, 1, 1], [], []>} : vector<2x20xbf16>, vector<20x20xbf16>, vector<2x20xf32> -> vector<2x20xf32>
    %55 = arith.addf %52, %54 : vector<2x20xf32>
    %56 = math.tanh %55 : vector<2x20xf32>
    %57 = vector.extract_strided_slice %0 {offsets = [0, 5], sizes = [2, 1], strides = [1, 1]} : vector<2x8xf32> to vector<2x1xf32>
    %58 = vector.broadcast %57 : vector<2x1xf32> to vector<2x20xf32>
    %59 = vector.broadcast %1 : vector<1x20xf32> to vector<2x20xf32>
    %60 = arith.mulf %58, %59 : vector<2x20xf32>
    %61 = vector.broadcast %2 : vector<1x20xf32> to vector<2x20xf32>
    %62 = arith.addf %60, %61 : vector<2x20xf32>
    %63 = arith.truncf %56 : vector<2x20xf32> to vector<2x20xbf16>
    %cst_17 = arith.constant dense<0.000000e+00> : vector<2x20xf32>
    %64 = tpu.matmul %63, %3, %cst_17 {dimension_numbers = #tpu.dot_dimension_numbers<[1], [0], [0], [1], [0, 0, 1, 1], [], []>} : vector<2x20xbf16>, vector<20x20xbf16>, vector<2x20xf32> -> vector<2x20xf32>
    %65 = arith.addf %62, %64 : vector<2x20xf32>
    %66 = math.tanh %65 : vector<2x20xf32>
    %67 = vector.extract_strided_slice %0 {offsets = [0, 6], sizes = [2, 1], strides = [1, 1]} : vector<2x8xf32> to vector<2x1xf32>
    %68 = vector.broadcast %67 : vector<2x1xf32> to vector<2x20xf32>
    %69 = vector.broadcast %1 : vector<1x20xf32> to vector<2x20xf32>
    %70 = arith.mulf %68, %69 : vector<2x20xf32>
    %71 = vector.broadcast %2 : vector<1x20xf32> to vector<2x20xf32>
    %72 = arith.addf %70, %71 : vector<2x20xf32>
    %73 = arith.truncf %66 : vector<2x20xf32> to vector<2x20xbf16>
    %cst_18 = arith.constant dense<0.000000e+00> : vector<2x20xf32>
    %74 = tpu.matmul %73, %3, %cst_18 {dimension_numbers = #tpu.dot_dimension_numbers<[1], [0], [0], [1], [0, 0, 1, 1], [], []>} : vector<2x20xbf16>, vector<20x20xbf16>, vector<2x20xf32> -> vector<2x20xf32>
    %75 = arith.addf %72, %74 : vector<2x20xf32>
    %76 = math.tanh %75 : vector<2x20xf32>
    %77 = vector.extract_strided_slice %0 {offsets = [0, 7], sizes = [2, 1], strides = [1, 1]} : vector<2x8xf32> to vector<2x1xf32>
    %78 = vector.broadcast %77 : vector<2x1xf32> to vector<2x20xf32>
    %79 = vector.broadcast %1 : vector<1x20xf32> to vector<2x20xf32>
    %80 = arith.mulf %78, %79 : vector<2x20xf32>
    %81 = vector.broadcast %2 : vector<1x20xf32> to vector<2x20xf32>
    %82 = arith.addf %80, %81 : vector<2x20xf32>
    %83 = arith.truncf %76 : vector<2x20xf32> to vector<2x20xbf16>
    %cst_19 = arith.constant dense<0.000000e+00> : vector<2x20xf32>
    %84 = tpu.matmul %83, %3, %cst_19 {dimension_numbers = #tpu.dot_dimension_numbers<[1], [0], [0], [1], [0, 0, 1, 1], [], []>} : vector<2x20xbf16>, vector<20x20xbf16>, vector<2x20xf32> -> vector<2x20xf32>
    %85 = arith.addf %82, %84 : vector<2x20xf32>
    %86 = math.tanh %85 : vector<2x20xf32>
    %c0_20 = arith.constant 0 : index
    %c0_21 = arith.constant 0 : index
    %87 = vector.load %arg8[%c0_20, %c0_21] : memref<2x20xf32, #tpu.memory_space<vmem>>, vector<2x20xf32>
    tpu.vector_store %arg8[%c0_20, %c0_21], %86 {strides = array<i32>} : memref<2x20xf32, #tpu.memory_space<vmem>>, vector<2x20xf32>,
    %88 = vector.broadcast %4 : vector<1x20xf32> to vector<2x20xf32>
    %89 = arith.mulf %16, %88 : vector<2x20xf32>
    %cst_22 = arith.constant dense<0.000000e+00> : vector<2xf32>
    %90 = vector.multi_reduction <add>, %89, %cst_22 [1] : vector<2x20xf32> to vector<2xf32>
    %91 = vector.shape_cast %90 : vector<2xf32> to vector<2x1xf32>
    %92 = vector.broadcast %4 : vector<1x20xf32> to vector<2x20xf32>
    %93 = arith.mulf %26, %92 : vector<2x20xf32>
    %cst_23 = arith.constant dense<0.000000e+00> : vector<2xf32>
    %94 = vector.multi_reduction <add>, %93, %cst_23 [1] : vector<2x20xf32> to vector<2xf32>
    %95 = vector.shape_cast %94 : vector<2xf32> to vector<2x1xf32>
    %96 = vector.broadcast %4 : vector<1x20xf32> to vector<2x20xf32>
    %97 = arith.mulf %36, %96 : vector<2x20xf32>
    %cst_24 = arith.constant dense<0.000000e+00> : vector<2xf32>
    %98 = vector.multi_reduction <add>, %97, %cst_24 [1] : vector<2x20xf32> to vector<2xf32>
    %99 = vector.shape_cast %98 : vector<2xf32> to vector<2x1xf32>
    %100 = vector.broadcast %4 : vector<1x20xf32> to vector<2x20xf32>
    %101 = arith.mulf %46, %100 : vector<2x20xf32>
    %cst_25 = arith.constant dense<0.000000e+00> : vector<2xf32>
    %102 = vector.multi_reduction <add>, %101, %cst_25 [1] : vector<2x20xf32> to vector<2xf32>
    %103 = vector.shape_cast %102 : vector<2xf32> to vector<2x1xf32>
    %104 = vector.broadcast %4 : vector<1x20xf32> to vector<2x20xf32>
    %105 = arith.mulf %56, %104 : vector<2x20xf32>
    %cst_26 = arith.constant dense<0.000000e+00> : vector<2xf32>
    %106 = vector.multi_reduction <add>, %105, %cst_26 [1] : vector<2x20xf32> to vector<2xf32>
    %107 = vector.shape_cast %106 : vector<2xf32> to vector<2x1xf32>
    %108 = vector.broadcast %4 : vector<1x20xf32> to vector<2x20xf32>
    %109 = arith.mulf %66, %108 : vector<2x20xf32>
    %cst_27 = arith.constant dense<0.000000e+00> : vector<2xf32>
    %110 = vector.multi_reduction <add>, %109, %cst_27 [1] : vector<2x20xf32> to vector<2xf32>
    %111 = vector.shape_cast %110 : vector<2xf32> to vector<2x1xf32>
    %112 = vector.broadcast %4 : vector<1x20xf32> to vector<2x20xf32>
    %113 = arith.mulf %76, %112 : vector<2x20xf32>
    %cst_28 = arith.constant dense<0.000000e+00> : vector<2xf32>
    %114 = vector.multi_reduction <add>, %113, %cst_28 [1] : vector<2x20xf32> to vector<2xf32>
    %115 = vector.shape_cast %114 : vector<2xf32> to vector<2x1xf32>
    %116 = vector.broadcast %4 : vector<1x20xf32> to vector<2x20xf32>
    %117 = arith.mulf %86, %116 : vector<2x20xf32>
    %cst_29 = arith.constant dense<0.000000e+00> : vector<2xf32>
    %118 = vector.multi_reduction <add>, %117, %cst_29 [1] : vector<2x20xf32> to vector<2xf32>
    %119 = vector.shape_cast %118 : vector<2xf32> to vector<2x1xf32>
    %120 = tpu.concatenate %91, %95, %99, %103, %107, %111, %115, %119 in 1 : vector<2x1xf32>, vector<2x1xf32>, vector<2x1xf32>, vector<2x1xf32>, vector<2x1xf32>, vector<2x1xf32>, vector<2x1xf32>, vector<2x1xf32> -> vector<2x8xf32>
    %121 = vector.broadcast %5 : f32 to vector<2x8xf32>
    %122 = arith.addf %120, %121 : vector<2x8xf32>
    %c0_30 = arith.constant 0 : index
    %c0_31 = arith.constant 0 : index
    %123 = vector.load %arg7[%c0_30, %c0_31] : memref<2x8xf32, #tpu.memory_space<vmem>>, vector<2x8xf32>
    tpu.vector_store %arg7[%c0_30, %c0_31], %122 {strides = array<i32>} : memref<2x8xf32, #tpu.memory_space<vmem>>, vector<2x8xf32>,
    return
  }
}

</mosaic_0001>

<llo_original>
// kernel: rnn_forward.1
$region0: #{rnn_forward.1}
  #allocation0 [shape = 'u32[]', space=smem, size = 0x4, offset = 0x4, fixed_abs, tag = 'smem constant byte address 0x4 - core index']
  #allocation1 [shape = 'u32[144,128]{1,0:T(1,128)}', space=vmem, size = 0x12000, scoped, tag = 'internal scratch']
  #allocation2 [shape = 'f32[1,1]{1,0:T(1,128)S(6)}', space=smem, size = 0x200, scoped, tag = 'scoped memory for rnn_forward.1']
  %s0 = inlined_call_operand.vmem [shape: f32[2,8], index: 0, kind: input, shape index: {}]
  %s1 = inlined_call_operand.vmem [shape: f32[2,20], index: 1, kind: input, shape index: {}]
  %s2 = inlined_call_operand.vmem [shape: f32[1,20], index: 2, kind: input, shape index: {}]
  %s3 = inlined_call_operand.vmem [shape: f32[1,20], index: 3, kind: input, shape index: {}]
  %s4 = inlined_call_operand.vmem [shape: bf16[20,20], index: 4, kind: input, shape index: {}]
  %s5 = inlined_call_operand.vmem [shape: f32[1,20], index: 5, kind: input, shape index: {}]
  %s6 = inlined_call_operand.<no memory space> [shape: f32[1,1], index: 6, kind: input, shape index: {}]
  %s7 = inlined_call_operand.hbm [shape: f32[2,8], index: 7, kind: output, shape index: {0}]
  %s8 = inlined_call_operand.hbm [shape: f32[2,20], index: 8, kind: output, shape index: {1}]
  %9 = xla_tuple %s7, %s8
  %s10 = sld [smem:[#allocation0]]
  $region46: #{rnn_forward.1} parent=0
    _
  %s12 = ssub.s32 1, %s10
  %s13 = scalar_select 0, %s12, %s10
  %14 = sst [smem:[#allocation2]] %s6
  $region1: #{rnn_forward.1} parent=0
    #allocation3 [shape = 'u8[1024]{0}', space=vmem, size = 0x400, scoped, tag = 'output window, operand 0, single buffered']
    #allocation4 [shape = 's32[1]{0}', space=sflag, size = 0x4, scoped, tag = 'scoped memory for rnn_forward.1']
    #allocation5 [shape = 'u8[1024]{0}', space=vmem, size = 0x400, scoped, tag = 'output window, operand 1, single buffered']
    #allocation6 [shape = 's32[1]{0}', space=sflag, size = 0x4, scoped, tag = 'scoped memory for rnn_forward.1']
    %15 = vsyncpa [#allocation4], 0
    %16 = vsyncpa [#allocation6], 0
    // Predicated region
    $region2: #{rnn_forward.1} parent=1 // pred_check
      _
    $region3: #{rnn_forward.1} parent=1 // pred_check_branch
      %18 = sbr.rel (0) target = $region5
    $region4: #{rnn_forward.1} parent=1 // pred_region
      _
    $region5: #{rnn_forward.1} parent=1 // pred_fallthru
      _
    // Predicated region
    $region6: #{rnn_forward.1} parent=1 // pred_check
      _
    $region7: #{rnn_forward.1} parent=1 // pred_check_branch
      %20 = sbr.rel (0) target = $region9
    $region8: #{rnn_forward.1} parent=1 // pred_region
      _
    $region9: #{rnn_forward.1} parent=1 // pred_fallthru
      _
    // Predicated region
    $region10: #{rnn_forward.1} parent=1 // pred_check
      _
    $region11: #{rnn_forward.1} parent=1 // pred_check_branch
      %22 = sbr.rel (0) target = $region13
    $region12: #{rnn_forward.1} parent=1 // pred_region
      _
    $region13: #{rnn_forward.1} parent=1 // pred_fallthru
      _
    // Predicated region
    $region14: #{rnn_forward.1} parent=1 // pred_check
      _
    $region15: #{rnn_forward.1} parent=1 // pred_check_branch
      %24 = sbr.rel (0) target = $region17
    $region16: #{rnn_forward.1} parent=1 // pred_region
      _
    $region17: #{rnn_forward.1} parent=1 // pred_fallthru
      _
    // Predicated region
    $region18: #{rnn_forward.1} parent=1 // pred_check
      _
    $region19: #{rnn_forward.1} parent=1 // pred_check_branch
      %26 = sbr.rel (0) target = $region21
    $region20: #{rnn_forward.1} parent=1 // pred_region
      _
    $region21: #{rnn_forward.1} parent=1 // pred_fallthru
      _
    // Predicated region
    $region22: #{rnn_forward.1} parent=1 // pred_check
      _
    $region23: #{rnn_forward.1} parent=1 // pred_check_branch
      %28 = sbr.rel (0) target = $region25
    $region24: #{rnn_forward.1} parent=1 // pred_region
      _
    $region25: #{rnn_forward.1} parent=1 // pred_fallthru
      _
    // Predicated region
    $region26: #{rnn_forward.1} parent=1 // pred_check
      _
    $region27: #{rnn_forward.1} parent=1 // pred_check_branch
      %30 = sbr.rel (0) target = $region29
    $region28: #{rnn_forward.1} parent=1 // pred_region
      _
    $region29: #{rnn_forward.1} parent=1 // pred_fallthru
      _
    %v32 = vld [vmem:[%s0] sm:$0x3]
    %v33 = vld [vmem:[%s2] sm:$0x1]
    %v34 = vld [vmem:[%s3] sm:$0x1]
    %v35 = vld [vmem:[%s4] sm:$0xf]
    %v36 = vld [vmem:[%s4 + $0x4] sm:$0xf]
    %v37 = vld [vmem:[%s4 + $0x8] sm:$0x3]
    %v38 = vld [vmem:[%s5] sm:$0x1]
    %s39 = sld [smem:[#allocation2]]
    %v40 = vld [vmem:[%s1] sm:$0x3]
    %42 = vset.pattern.permute.xlu0 0
    %43 = vperm.xlu0 %42, %v32
    %v44 = vpop.permute.xlu0 %43
    %v47 = vlaneseq
    %v48 = vshrl.u32 %v47, 7
    %v49 = vsub.s32 0, %v48
    %v50 = vrot.slane %v33, %v49
    %v52 = vmul.f32 %v44, %v50
    %v54 = vlaneseq
    %v55 = vshrl.u32 %v54, 7
    %v56 = vsub.s32 0, %v55
    %v57 = vrot.slane %v34, %v56
    %v59 = vadd.f32 %v52, %v57
    %v60 = vpack.c.bf16 %v40, %v40
    %v64 = vunpack.c.l.b16 %v35
    %v65 = vunpack.c.l.b16 %v36
    %v66 = vunpack.c.l.b16 %v37
    %v67 = vpack.c.b16 %v65, %v64
    %v68 = vpack.c.b16 %v66, %v66
    %vm70 = vcmask 162816
    %v72 = vsel %vm70, %v60, 0
    %vm74 = vcmask 1041408
    %v76 = vsel %vm74, %v68, 0
    %78 = vmatprep.subr.bf16.mxu0 0
    %79 = vmatpush1.bf16.msra.mxu0 0
    %80 = vmatprep.subr.bf16.mxu0 0
    %81 = vmatpush1.bf16.msra.mxu0 0
    %82 = vmatprep.subr.bf16.mxu0 0
    %83 = vmatpush1.bf16.msra.mxu0 0
    %84 = vmatprep.subr.bf16.mxu0 0
    %85 = vmatpush1.bf16.msra.mxu0 0
    %86 = vmatprep.subr.bf16.mxu0 0
    %87 = vmatpush1.bf16.msra.mxu0 0
    %88 = vmatprep.subr.bf16.mxu0 0
    %89 = vmatpush1.bf16.msra.mxu0 0
    %90 = vmatprep.subr.bf16.mxu0 0
    %91 = vmatpush1.bf16.msra.mxu0 %v76
    %92 = vmatprep.subr.bf16.mxu0 0
    %93 = vmatpush1.bf16.msra.mxu0 %v67
    %94 = vmatprep.subr.bf16.mxu0 0
    %95 = vmatpush2.bf16.msra.mxu0 0
    %96 = vmatprep.subr.bf16.mxu0 0
    %97 = vmatpush2.bf16.msra.mxu0 0
    %98 = vmatprep.subr.bf16.mxu0 0
    %99 = vmatpush2.bf16.msra.mxu0 0
    %100 = vmatprep.subr.bf16.mxu0 0
    %101 = vmatpush2.bf16.msra.mxu0 0
    %102 = vmatprep.subr.bf16.mxu0 0
    %103 = vmatpush2.bf16.msra.mxu0 0
    %104 = vmatprep.subr.bf16.mxu0 0
    %105 = vmatpush2.bf16.msra.mxu0 0
    %106 = vmatprep.subr.bf16.mxu0 0
    %107 = vmatpush2.bf16.msra.mxu0 0
    %108 = vmatprep.subr.bf16.mxu0 0
    %109 = vmatpush2.bf16.msra.mxu0 0
    %110 = vmatprep.mubr.bf16.mxu0 0
    %111 = vmatmul.mubr.bf16.gmra.mxu0 %v72
    %v112 = vpop.f32.mrf.mxu0
    %v113 = vadd.f32 0.0, %v112
    %v114 = vpop.f32.mrf.mxu0
    %v115 = vpop.f32.mrf.mxu0
    %v116 = vpop.f32.mrf.mxu0
    %117 = vdwg.mxu0
    %v118 = vadd.f32 %v59, %v113
    %v119 = vtanh.pop %v118
    %120 = vset.pattern.permute.xlu0 1
    %121 = vperm.xlu0 %120, %v32
    %v122 = vpop.permute.xlu0 %121
    %v124 = vmul.f32 %v122, %v50
    %v125 = vadd.f32 %v124, %v57
    %v126 = vpack.c.bf16 %v119, %v119
    %v128 = vsel %vm70, %v126, 0
    %130 = vmatprep.subr.bf16.mxu0 0
    %131 = vmatpush1.bf16.msra.mxu0 0
    %132 = vmatprep.subr.bf16.mxu0 0
    %133 = vmatpush1.bf16.msra.mxu0 0
    %134 = vmatprep.subr.bf16.mxu0 0
    %135 = vmatpush1.bf16.msra.mxu0 0
    %136 = vmatprep.subr.bf16.mxu0 0
    %137 = vmatpush1.bf16.msra.mxu0 0
    %138 = vmatprep.subr.bf16.mxu0 0
    %139 = vmatpush1.bf16.msra.mxu0 0
    %140 = vmatprep.subr.bf16.mxu0 0
    %141 = vmatpush1.bf16.msra.mxu0 0
    %142 = vmatprep.subr.bf16.mxu0 0
    %143 = vmatpush1.bf16.msra.mxu0 %v76
    %144 = vmatprep.subr.bf16.mxu0 0
    %145 = vmatpush1.bf16.msra.mxu0 %v67
    %146 = vmatprep.subr.bf16.mxu0 0
    %147 = vmatpush2.bf16.msra.mxu0 0
    %148 = vmatprep.subr.bf16.mxu0 0
    %149 = vmatpush2.bf16.msra.mxu0 0
    %150 = vmatprep.subr.bf16.mxu0 0
    %151 = vmatpush2.bf16.msra.mxu0 0
    %152 = vmatprep.subr.bf16.mxu0 0
    %153 = vmatpush2.bf16.msra.mxu0 0
    %154 = vmatprep.subr.bf16.mxu0 0
    %155 = vmatpush2.bf16.msra.mxu0 0
    %156 = vmatprep.subr.bf16.mxu0 0
    %157 = vmatpush2.bf16.msra.mxu0 0
    %158 = vmatprep.subr.bf16.mxu0 0
    %159 = vmatpush2.bf16.msra.mxu0 0
    %160 = vmatprep.subr.bf16.mxu0 0
    %161 = vmatpush2.bf16.msra.mxu0 0
    %162 = vmatprep.mubr.bf16.mxu0 0
    %163 = vmatmul.mubr.bf16.gmra.mxu0 %v128
    %v164 = vpop.f32.mrf.mxu0
    %v165 = vadd.f32 0.0, %v164
    %v166 = vpop.f32.mrf.mxu0
    %v167 = vpop.f32.mrf.mxu0
    %v168 = vpop.f32.mrf.mxu0
    %169 = vdwg.mxu0
    %v170 = vadd.f32 %v125, %v165
    %v171 = vtanh.pop %v170
    %172 = vset.pattern.permute.xlu0 2
    %173 = vperm.xlu0 %172, %v32
    %v174 = vpop.permute.xlu0 %173
    %v176 = vmul.f32 %v174, %v50
    %v177 = vadd.f32 %v176, %v57
    %v178 = vpack.c.bf16 %v171, %v171
    %v180 = vsel %vm70, %v178, 0
    %182 = vmatprep.subr.bf16.mxu0 0
    %183 = vmatpush1.bf16.msra.mxu0 0
    %184 = vmatprep.subr.bf16.mxu0 0
    %185 = vmatpush1.bf16.msra.mxu0 0
    %186 = vmatprep.subr.bf16.mxu0 0
    %187 = vmatpush1.bf16.msra.mxu0 0
    %188 = vmatprep.subr.bf16.mxu0 0
    %189 = vmatpush1.bf16.msra.mxu0 0
    %190 = vmatprep.subr.bf16.mxu0 0
    %191 = vmatpush1.bf16.msra.mxu0 0
    %192 = vmatprep.subr.bf16.mxu0 0
    %193 = vmatpush1.bf16.msra.mxu0 0
    %194 = vmatprep.subr.bf16.mxu0 0
    %195 = vmatpush1.bf16.msra.mxu0 %v76
    %196 = vmatprep.subr.bf16.mxu0 0
    %197 = vmatpush1.bf16.msra.mxu0 %v67
    %198 = vmatprep.subr.bf16.mxu0 0
    %199 = vmatpush2.bf16.msra.mxu0 0
    %200 = vmatprep.subr.bf16.mxu0 0
    %201 = vmatpush2.bf16.msra.mxu0 0
    %202 = vmatprep.subr.bf16.mxu0 0
    %203 = vmatpush2.bf16.msra.mxu0 0
    %204 = vmatprep.subr.bf16.mxu0 0
    %205 = vmatpush2.bf16.msra.mxu0 0
    %206 = vmatprep.subr.bf16.mxu0 0
    %207 = vmatpush2.bf16.msra.mxu0 0
    %208 = vmatprep.subr.bf16.mxu0 0
    %209 = vmatpush2.bf16.msra.mxu0 0
    %210 = vmatprep.subr.bf16.mxu0 0
    %211 = vmatpush2.bf16.msra.mxu0 0
    %212 = vmatprep.subr.bf16.mxu0 0
    %213 = vmatpush2.bf16.msra.mxu0 0
    %214 = vmatprep.mubr.bf16.mxu0 0
    %215 = vmatmul.mubr.bf16.gmra.mxu0 %v180
    %v216 = vpop.f32.mrf.mxu0
    %v217 = vadd.f32 0.0, %v216
    %v218 = vpop.f32.mrf.mxu0
    %v219 = vpop.f32.mrf.mxu0
    %v220 = vpop.f32.mrf.mxu0
    %221 = vdwg.mxu0
    %v222 = vadd.f32 %v177, %v217
    %v223 = vtanh.pop %v222
    %224 = vset.pattern.permute.xlu0 3
    %225 = vperm.xlu0 %224, %v32
    %v226 = vpop.permute.xlu0 %225
    %v228 = vmul.f32 %v226, %v50
    %v229 = vadd.f32 %v228, %v57
    %v230 = vpack.c.bf16 %v223, %v223
    %v232 = vsel %vm70, %v230, 0
    %234 = vmatprep.subr.bf16.mxu0 0
    %235 = vmatpush1.bf16.msra.mxu0 0
    %236 = vmatprep.subr.bf16.mxu0 0
    %237 = vmatpush1.bf16.msra.mxu0 0
    %238 = vmatprep.subr.bf16.mxu0 0
    %239 = vmatpush1.bf16.msra.mxu0 0
    %240 = vmatprep.subr.bf16.mxu0 0
    %241 = vmatpush1.bf16.msra.mxu0 0
    %242 = vmatprep.subr.bf16.mxu0 0
    %243 = vmatpush1.bf16.msra.mxu0 0
    %244 = vmatprep.subr.bf16.mxu0 0
    %245 = vmatpush1.bf16.msra.mxu0 0
    %246 = vmatprep.subr.bf16.mxu0 0
    %247 = vmatpush1.bf16.msra.mxu0 %v76
    %248 = vmatprep.subr.bf16.mxu0 0
    %249 = vmatpush1.bf16.msra.mxu0 %v67
    %250 = vmatprep.subr.bf16.mxu0 0
    %251 = vmatpush2.bf16.msra.mxu0 0
    %252 = vmatprep.subr.bf16.mxu0 0
    %253 = vmatpush2.bf16.msra.mxu0 0
    %254 = vmatprep.subr.bf16.mxu0 0
    %255 = vmatpush2.bf16.msra.mxu0 0
    %256 = vmatprep.subr.bf16.mxu0 0
    %257 = vmatpush2.bf16.msra.mxu0 0
    %258 = vmatprep.subr.bf16.mxu0 0
    %259 = vmatpush2.bf16.msra.mxu0 0
    %260 = vmatprep.subr.bf16.mxu0 0
    %261 = vmatpush2.bf16.msra.mxu0 0
    %262 = vmatprep.subr.bf16.mxu0 0
    %263 = vmatpush2.bf16.msra.mxu0 0
    %264 = vmatprep.subr.bf16.mxu0 0
    %265 = vmatpush2.bf16.msra.mxu0 0
    %266 = vmatprep.mubr.bf16.mxu0 0
    %267 = vmatmul.mubr.bf16.gmra.mxu0 %v232
    %v268 = vpop.f32.mrf.mxu0
    %v269 = vadd.f32 0.0, %v268
    %v270 = vpop.f32.mrf.mxu0
    %v271 = vpop.f32.mrf.mxu0
    %v272 = vpop.f32.mrf.mxu0
    %273 = vdwg.mxu0
    %v274 = vadd.f32 %v229, %v269
    %v275 = vtanh.pop %v274
    %276 = vset.pattern.permute.xlu0 4
    %277 = vperm.xlu0 %276, %v32
    %v278 = vpop.permute.xlu0 %277
    %v280 = vmul.f32 %v278, %v50
    %v281 = vadd.f32 %v280, %v57
    %v282 = vpack.c.bf16 %v275, %v275
    %v284 = vsel %vm70, %v282, 0
    %286 = vmatprep.subr.bf16.mxu0 0
    %287 = vmatpush1.bf16.msra.mxu0 0
    %288 = vmatprep.subr.bf16.mxu0 0
    %289 = vmatpush1.bf16.msra.mxu0 0
    %290 = vmatprep.subr.bf16.mxu0 0
    %291 = vmatpush1.bf16.msra.mxu0 0
    %292 = vmatprep.subr.bf16.mxu0 0
    %293 = vmatpush1.bf16.msra.mxu0 0
    %294 = vmatprep.subr.bf16.mxu0 0
    %295 = vmatpush1.bf16.msra.mxu0 0
    %296 = vmatprep.subr.bf16.mxu0 0
    %297 = vmatpush1.bf16.msra.mxu0 0
    %298 = vmatprep.subr.bf16.mxu0 0
    %299 = vmatpush1.bf16.msra.mxu0 %v76
    %300 = vmatprep.subr.bf16.mxu0 0
    %301 = vmatpush1.bf16.msra.mxu0 %v67
    %302 = vmatprep.subr.bf16.mxu0 0
    %303 = vmatpush2.bf16.msra.mxu0 0
    %304 = vmatprep.subr.bf16.mxu0 0
    %305 = vmatpush2.bf16.msra.mxu0 0
    %306 = vmatprep.subr.bf16.mxu0 0
    %307 = vmatpush2.bf16.msra.mxu0 0
    %308 = vmatprep.subr.bf16.mxu0 0
    %309 = vmatpush2.bf16.msra.mxu0 0
    %310 = vmatprep.subr.bf16.mxu0 0
    %311 = vmatpush2.bf16.msra.mxu0 0
    %312 = vmatprep.subr.bf16.mxu0 0
    %313 = vmatpush2.bf16.msra.mxu0 0
    %314 = vmatprep.subr.bf16.mxu0 0
    %315 = vmatpush2.bf16.msra.mxu0 0
    %316 = vmatprep.subr.bf16.mxu0 0
    %317 = vmatpush2.bf16.msra.mxu0 0
    %318 = vmatprep.mubr.bf16.mxu0 0
    %319 = vmatmul.mubr.bf16.gmra.mxu0 %v284
    %v320 = vpop.f32.mrf.mxu0
    %v321 = vadd.f32 0.0, %v320
    %v322 = vpop.f32.mrf.mxu0
    %v323 = vpop.f32.mrf.mxu0
    %v324 = vpop.f32.mrf.mxu0
    %325 = vdwg.mxu0
    %v326 = vadd.f32 %v281, %v321
    %v327 = vtanh.pop %v326
    %328 = vset.pattern.permute.xlu0 5
    %329 = vperm.xlu0 %328, %v32
    %v330 = vpop.permute.xlu0 %329
    %v332 = vmul.f32 %v330, %v50
    %v333 = vadd.f32 %v332, %v57
    %v334 = vpack.c.bf16 %v327, %v327
    %v336 = vsel %vm70, %v334, 0
    %338 = vmatprep.subr.bf16.mxu0 0
    %339 = vmatpush1.bf16.msra.mxu0 0
    %340 = vmatprep.subr.bf16.mxu0 0
    %341 = vmatpush1.bf16.msra.mxu0 0
    %342 = vmatprep.subr.bf16.mxu0 0
    %343 = vmatpush1.bf16.msra.mxu0 0
    %344 = vmatprep.subr.bf16.mxu0 0
    %345 = vmatpush1.bf16.msra.mxu0 0
    %346 = vmatprep.subr.bf16.mxu0 0
    %347 = vmatpush1.bf16.msra.mxu0 0
    %348 = vmatprep.subr.bf16.mxu0 0
    %349 = vmatpush1.bf16.msra.mxu0 0
    %350 = vmatprep.subr.bf16.mxu0 0
    %351 = vmatpush1.bf16.msra.mxu0 %v76
    %352 = vmatprep.subr.bf16.mxu0 0
    %353 = vmatpush1.bf16.msra.mxu0 %v67
    %354 = vmatprep.subr.bf16.mxu0 0
    %355 = vmatpush2.bf16.msra.mxu0 0
    %356 = vmatprep.subr.bf16.mxu0 0
    %357 = vmatpush2.bf16.msra.mxu0 0
    %358 = vmatprep.subr.bf16.mxu0 0
    %359 = vmatpush2.bf16.msra.mxu0 0
    %360 = vmatprep.subr.bf16.mxu0 0
    %361 = vmatpush2.bf16.msra.mxu0 0
    %362 = vmatprep.subr.bf16.mxu0 0
    %363 = vmatpush2.bf16.msra.mxu0 0
    %364 = vmatprep.subr.bf16.mxu0 0
    %365 = vmatpush2.bf16.msra.mxu0 0
    %366 = vmatprep.subr.bf16.mxu0 0
    %367 = vmatpush2.bf16.msra.mxu0 0
    %368 = vmatprep.subr.bf16.mxu0 0
    %369 = vmatpush2.bf16.msra.mxu0 0
    %370 = vmatprep.mubr.bf16.mxu0 0
    %371 = vmatmul.mubr.bf16.gmra.mxu0 %v336
    %v372 = vpop.f32.mrf.mxu0
    %v373 = vadd.f32 0.0, %v372
    %v374 = vpop.f32.mrf.mxu0
    %v375 = vpop.f32.mrf.mxu0
    %v376 = vpop.f32.mrf.mxu0
    %377 = vdwg.mxu0
    %v378 = vadd.f32 %v333, %v373
    %v379 = vtanh.pop %v378
    %380 = vset.pattern.permute.xlu0 6
    %381 = vperm.xlu0 %380, %v32
    %v382 = vpop.permute.xlu0 %381
    %v384 = vmul.f32 %v382, %v50
    %v385 = vadd.f32 %v384, %v57
    %v386 = vpack.c.bf16 %v379, %v379
    %v388 = vsel %vm70, %v386, 0
    %390 = vmatprep.subr.bf16.mxu0 0
    %391 = vmatpush1.bf16.msra.mxu0 0
    %392 = vmatprep.subr.bf16.mxu0 0
    %393 = vmatpush1.bf16.msra.mxu0 0
    %394 = vmatprep.subr.bf16.mxu0 0
    %395 = vmatpush1.bf16.msra.mxu0 0
    %396 = vmatprep.subr.bf16.mxu0 0
    %397 = vmatpush1.bf16.msra.mxu0 0
    %398 = vmatprep.subr.bf16.mxu0 0
    %399 = vmatpush1.bf16.msra.mxu0 0
    %400 = vmatprep.subr.bf16.mxu0 0
    %401 = vmatpush1.bf16.msra.mxu0 0
    %402 = vmatprep.subr.bf16.mxu0 0
    %403 = vmatpush1.bf16.msra.mxu0 %v76
    %404 = vmatprep.subr.bf16.mxu0 0
    %405 = vmatpush1.bf16.msra.mxu0 %v67
    %406 = vmatprep.subr.bf16.mxu0 0
    %407 = vmatpush2.bf16.msra.mxu0 0
    %408 = vmatprep.subr.bf16.mxu0 0
    %409 = vmatpush2.bf16.msra.mxu0 0
    %410 = vmatprep.subr.bf16.mxu0 0
    %411 = vmatpush2.bf16.msra.mxu0 0
    %412 = vmatprep.subr.bf16.mxu0 0
    %413 = vmatpush2.bf16.msra.mxu0 0
    %414 = vmatprep.subr.bf16.mxu0 0
    %415 = vmatpush2.bf16.msra.mxu0 0
    %416 = vmatprep.subr.bf16.mxu0 0
    %417 = vmatpush2.bf16.msra.mxu0 0
    %418 = vmatprep.subr.bf16.mxu0 0
    %419 = vmatpush2.bf16.msra.mxu0 0
    %420 = vmatprep.subr.bf16.mxu0 0
    %421 = vmatpush2.bf16.msra.mxu0 0
    %422 = vmatprep.mubr.bf16.mxu0 0
    %423 = vmatmul.mubr.bf16.gmra.mxu0 %v388
    %v424 = vpop.f32.mrf.mxu0
    %v425 = vadd.f32 0.0, %v424
    %v426 = vpop.f32.mrf.mxu0
    %v427 = vpop.f32.mrf.mxu0
    %v428 = vpop.f32.mrf.mxu0
    %429 = vdwg.mxu0
    %v430 = vadd.f32 %v385, %v425
    %v431 = vtanh.pop %v430
    %432 = vset.pattern.permute.xlu0 7
    %433 = vperm.xlu0 %432, %v32
    %v434 = vpop.permute.xlu0 %433
    %v436 = vmul.f32 %v434, %v50
    %v437 = vadd.f32 %v436, %v57
    %v438 = vpack.c.bf16 %v431, %v431
    %v440 = vsel %vm70, %v438, 0
    %442 = vmatprep.subr.bf16.mxu0 0
    %443 = vmatpush1.bf16.msra.mxu0 0
    %444 = vmatprep.subr.bf16.mxu0 0
    %445 = vmatpush1.bf16.msra.mxu0 0
    %446 = vmatprep.subr.bf16.mxu0 0
    %447 = vmatpush1.bf16.msra.mxu0 0
    %448 = vmatprep.subr.bf16.mxu0 0
    %449 = vmatpush1.bf16.msra.mxu0 0
    %450 = vmatprep.subr.bf16.mxu0 0
    %451 = vmatpush1.bf16.msra.mxu0 0
    %452 = vmatprep.subr.bf16.mxu0 0
    %453 = vmatpush1.bf16.msra.mxu0 0
    %454 = vmatprep.subr.bf16.mxu0 0
    %455 = vmatpush1.bf16.msra.mxu0 %v76
    %456 = vmatprep.subr.bf16.mxu0 0
    %457 = vmatpush1.bf16.msra.mxu0 %v67
    %458 = vmatprep.subr.bf16.mxu0 0
    %459 = vmatpush2.bf16.msra.mxu0 0
    %460 = vmatprep.subr.bf16.mxu0 0
    %461 = vmatpush2.bf16.msra.mxu0 0
    %462 = vmatprep.subr.bf16.mxu0 0
    %463 = vmatpush2.bf16.msra.mxu0 0
    %464 = vmatprep.subr.bf16.mxu0 0
    %465 = vmatpush2.bf16.msra.mxu0 0
    %466 = vmatprep.subr.bf16.mxu0 0
    %467 = vmatpush2.bf16.msra.mxu0 0
    %468 = vmatprep.subr.bf16.mxu0 0
    %469 = vmatpush2.bf16.msra.mxu0 0
    %470 = vmatprep.subr.bf16.mxu0 0
    %471 = vmatpush2.bf16.msra.mxu0 0
    %472 = vmatprep.subr.bf16.mxu0 0
    %473 = vmatpush2.bf16.msra.mxu0 0
    %474 = vmatprep.mubr.bf16.mxu0 0
    %475 = vmatmul.mubr.bf16.gmra.mxu0 %v440
    %v476 = vpop.f32.mrf.mxu0
    %v477 = vadd.f32 0.0, %v476
    %v478 = vpop.f32.mrf.mxu0
    %v479 = vpop.f32.mrf.mxu0
    %v480 = vpop.f32.mrf.mxu0
    %481 = vdwg.mxu0
    %v482 = vadd.f32 %v437, %v477
    %v483 = vtanh.pop %v482
    %vm484 = vcmask 156672
    %485 = vst.msk [vmem:[#allocation5] sm:$0x3] %vm484, %v483
    %v487 = vlaneseq
    %v488 = vshrl.u32 %v487, 7
    %v489 = vsub.s32 0, %v488
    %v490 = vrot.slane %v38, %v489
    %v492 = vmul.f32 %v119, %v490
    %v493 = vsel %vm484, %v492, 0.0
    %494 = vadd.xlane.f32.xlu0 %v493
    %v495 = vpop.xlane.xlu0 %494
    %v496 = vmul.f32 %v171, %v490
    %v497 = vsel %vm484, %v496, 0.0
    %498 = vadd.xlane.f32.xlu0 %v497
    %v499 = vpop.xlane.xlu0 %498
    %v500 = vmul.f32 %v223, %v490
    %v501 = vsel %vm484, %v500, 0.0
    %502 = vadd.xlane.f32.xlu0 %v501
    %v503 = vpop.xlane.xlu0 %502
    %v504 = vmul.f32 %v275, %v490
    %v505 = vsel %vm484, %v504, 0.0
    %506 = vadd.xlane.f32.xlu0 %v505
    %v507 = vpop.xlane.xlu0 %506
    %v508 = vmul.f32 %v327, %v490
    %v509 = vsel %vm484, %v508, 0.0
    %510 = vadd.xlane.f32.xlu0 %v509
    %v511 = vpop.xlane.xlu0 %510
    %v512 = vmul.f32 %v379, %v490
    %v513 = vsel %vm484, %v512, 0.0
    %514 = vadd.xlane.f32.xlu0 %v513
    %v515 = vpop.xlane.xlu0 %514
    %v516 = vmul.f32 %v431, %v490
    %v517 = vsel %vm484, %v516, 0.0
    %518 = vadd.xlane.f32.xlu0 %v517
    %v519 = vpop.xlane.xlu0 %518
    %v520 = vmul.f32 %v483, %v490
    %v521 = vsel %vm484, %v520, 0.0
    %522 = vadd.xlane.f32.xlu0 %v521
    %v523 = vpop.xlane.xlu0 %522
    %vm524 = vcmask 7168
    %v525 = vsel %vm524, %v495, %v499
    %vm526 = vcmask 15360
    %v527 = vsel %vm526, %v525, %v503
    %vm528 = vcmask 23552
    %v529 = vsel %vm528, %v527, %v507
    %vm530 = vcmask 31744
    %v531 = vsel %vm530, %v529, %v511
    %vm532 = vcmask 39936
    %v533 = vsel %vm532, %v531, %v515
    %vm534 = vcmask 48128
    %v535 = vsel %vm534, %v533, %v519
    %vm536 = vcmask 56320
    %v537 = vsel %vm536, %v535, %v523
    %v538 = vstv %s39
    %v539 = vadd.f32 %v537, %v538
    %vm540 = vcmask 58368
    %541 = vst.msk [vmem:[#allocation3] sm:$0x3] %vm540, %v539
    // Predicated region
    $region30: #{rnn_forward.1} parent=1 // pred_check
      _
    $region31: #{rnn_forward.1} parent=1 // pred_check_branch
      %543 = sbr.rel (0) target = $region33
    $region32: #{rnn_forward.1} parent=1 // pred_region
      %s545 = ssub.s32 32, 32
      %546 = vsyncadd [#allocation4], %s545
      %s548 = sshll.u32 [#allocation3], 4
      %s549 = int_to_ptr.vmem [resolvable:$true] %s548
      %551 = dma.vmem_to_hbm [thread:$0]  %s549, 32, %s7, [#allocation4]
    $region33: #{rnn_forward.1} parent=1 // pred_fallthru
      _
    // Predicated region
    $region34: #{rnn_forward.1} parent=1 // pred_check
      _
    $region35: #{rnn_forward.1} parent=1 // pred_check_branch
      %553 = sbr.rel (0) target = $region37
    $region36: #{rnn_forward.1} parent=1 // pred_region
      %s555 = ssub.s32 32, 32
      %556 = vsyncadd [#allocation6], %s555
      %s558 = sshll.u32 [#allocation5], 4
      %s559 = int_to_ptr.vmem [resolvable:$true] %s558
      %561 = dma.vmem_to_hbm [thread:$0]  %s559, 32, %s8, [#allocation6]
    $region37: #{rnn_forward.1} parent=1 // pred_fallthru
      _
    // Predicated region
    $region38: #{rnn_forward.1} parent=1 // pred_check
      _
    $region39: #{rnn_forward.1} parent=1 // pred_check_branch
      %563 = sbr.rel (0) target = $region41
    $region40: #{rnn_forward.1} parent=1 // pred_region
      %564 = dma.done [#allocation4], 32
    $region41: #{rnn_forward.1} parent=1 // pred_fallthru
      _
    // Predicated region
    $region42: #{rnn_forward.1} parent=1 // pred_check
      _
    $region43: #{rnn_forward.1} parent=1 // pred_check_branch
      %566 = sbr.rel (0) target = $region45
    $region44: #{rnn_forward.1} parent=1 // pred_region
      %567 = dma.done [#allocation6], 32
    $region45: #{rnn_forward.1} parent=1 // pred_fallthru
      _
    %568 = vsyncpa [#allocation4], 1
    %569 = vsyncpa [#allocation6], 1

</llo_original>
